<compile_context>
chip_gen: v5e
topology: v5e:2x2
jax: 0.10.0
libtpu: 0.0.40
codegen_flags: <defaults>
</compile_context>

<pallas_src>
import functools

import jax
import jax.numpy as jnp
import numpy as np
from jax import lax
from jax.experimental import pallas as pl
from jax.experimental.pallas import tpu as pltpu

_MAX_UNROLL_H = 16


def convdu_kernel(x_ref, w_ref, b_ref, a_ref, o_ref):
    # x_ref: (H, R, C) input rows for this R-tile (bf16 or f32)
    # w_ref: (C, C)    transposed centre-tap conv weight (Cin, Cout), bf16
    # b_ref: (1, C)    conv bias (f32)
    # a_ref: (1,)      PReLU alpha (scalar, SMEM)
    # o_ref: (H, R, C) output rows for this R-tile
    h = x_ref.shape[0]
    alpha = a_ref[0]

    # Hoist loop invariants (JAX does not CSE these across scan steps).
    w = w_ref[...]                      # (C, C) bf16 -- invariant MXU RHS
    b = b_ref[...]                      # (1, C) f32  -- broadcasts in the add
    mm_dtype = w.dtype
    out_dtype = o_ref.dtype

    def step(carry, resid_f32):
        # carry: (R, C) mm_dtype matmul LHS; resid_f32: (R, C) f32 residual row.
        y = jnp.dot(carry, w, preferred_element_type=jnp.float32) + b
        y = jnp.where(y > 0, y, alpha * y)          # PReLU, scalar alpha
        return y + resid_f32

    row0 = x_ref[0]
    o_ref[0] = row0.astype(out_dtype)
    carry = row0.astype(mm_dtype)

    if h <= _MAX_UNROLL_H:
        # ---- down pass (fully unrolled; H is static and small) ----
        for i in range(1, h):
            out = step(carry, x_ref[i].astype(jnp.float32))
            o_ref[i] = out.astype(out_dtype)
            carry = out.astype(mm_dtype)
        # ---- up pass (row h-1 unchanged; o_ref[pos] holds the down value) ----
        for pos in range(h - 2, -1, -1):
            out = step(carry, o_ref[pos].astype(jnp.float32))
            o_ref[pos] = out.astype(out_dtype)
            carry = out.astype(mm_dtype)
    else:
        # ---- large H: rolled scans with dynamic first-axis indexing ----
        def down_body(i, carry):
            out = step(carry, x_ref[i].astype(jnp.float32))
            o_ref[i] = out.astype(out_dtype)
            return out.astype(mm_dtype)

        carry = lax.fori_loop(1, h, down_body, carry, unroll=2)

        def up_body(j, carry):
            pos = h - 2 - j
            out = step(carry, o_ref[pos].astype(jnp.float32))
            o_ref[pos] = out.astype(out_dtype)
            return out.astype(mm_dtype)

        lax.fori_loop(0, h - 1, up_body, carry, unroll=2)


def _vmem_limit_bytes():
    try:
        cap = int(pltpu.get_tpu_info().vmem_capacity_bytes)
    except Exception:
        cap = 64 << 20                        # conservative (v7x per-TC VMEM)
    return min((cap * 3) // 4, 96 << 20)


def _pick_tile_r(r, h, c, in_bytes, out_bytes, budget):
    """Largest sublane-aligned R tile whose double-buffered blocks + scan
    temporaries fit `budget`, keeping >=2 grid blocks for large R (pipelining
    and both v7x TensorCores)."""
    fixed = c * c * 2 + 8 * c * 4                       # weight (bf16) + bias
    per_row = 2 * h * c * (in_bytes + out_bytes)        # x/out blocks, x2 double-buffer
    per_row += 4 * c * 4                                # carry / matmul / prelu temporaries
    max_fit = max(8, (budget - fixed) // max(per_row, 1))
    if r <= 256 and r <= max_fit:
        return r                                        # tiny problem: one full-extent block
    # >=8 blocks when tiles can stay >=512 rows, else >=2 blocks.
    target_blocks = 8 if r >= 8 * 512 else 2
    cap = min(max_fit, 4096, max(r // target_blocks, 128))
    tile = 8
    while tile * 2 <= cap:
        tile *= 2
    return tile


def convdu_rows(x_rows, w_t, bias, alpha, *, out_dtype=jnp.float32):
    """Channels-last core: x_rows (H, R, C) -> (H, R, C), no layout transposes.
    Prefer this entry point from a channels-last model (layout is free).
    Note: C should be a multiple of 128 for full lane utilisation (full-extent
    C blocks still lower otherwise)."""
    h, r, c = x_rows.shape
    b2 = bias.astype(jnp.float32).reshape(1, c)
    a1 = jnp.asarray(alpha, jnp.float32).reshape(1)

    vmem_limit = _vmem_limit_bytes()
    tile_r = _pick_tile_r(r, h, c, x_rows.dtype.itemsize,
                          jnp.dtype(out_dtype).itemsize, vmem_limit)
    grid = (pl.cdiv(r, tile_r),)        # ragged last block is masked by Pallas

    return pl.pallas_call(
        convdu_kernel,
        out_shape=jax.ShapeDtypeStruct((h, r, c), out_dtype),
        grid=grid,
        in_specs=[
            pl.BlockSpec((h, tile_r, c), lambda i: (0, i, 0)),       # x rows
            pl.BlockSpec((c, c), lambda i: (0, 0)),                  # weight (Cin, Cout)
            pl.BlockSpec((1, c), lambda i: (0, 0)),                  # bias
            pl.BlockSpec(memory_space=pltpu.MemorySpace.SMEM),       # prelu alpha
        ],
        out_specs=pl.BlockSpec((h, tile_r, c), lambda i: (0, i, 0)),
        compiler_params=pltpu.CompilerParams(
            dimension_semantics=("parallel",),
            vmem_limit_bytes=vmem_limit,
        ),
    )(x_rows, w_t, b2, a1)


@functools.partial(jax.jit, static_argnames=("io_dtype", "out_dtype"))
def convdu_pallas(x_nchw, weight, bias, alpha,
                  io_dtype=jnp.bfloat16, out_dtype=jnp.float32):
    """PyTorch-interface wrapper.  x_nchw: (N,C,H,W); weight: (C,C,KH,1);
    bias: (C,); alpha: scalar PReLU slope.

    io_dtype=bf16 halves input HBM traffic (rounding equivalent to the bf16
    MXU-LHS rounding already used); out_dtype=bf16 additionally halves output
    traffic if downstream tolerates it.
    """
    n, c, h, w = x_nchw.shape
    cout, cin, kh, kw = weight.shape
    # The centre-tap collapse of the (KH,1) conv is valid ONLY because the
    # module convolves single-row (N,C,1,W) slices with zero horizontal
    # padding; guard against other uses silently dropping taps.
    assert kw == 1 and kh % 2 == 1 and cout == c and cin == c, \
        "convDU single-row / centre-tap assumption violated"
    w_t = weight[:, :, (kh - 1) // 2, 0].T.astype(jnp.bfloat16)   # (Cin, Cout)

    # TODO(synk): these NCHW<->(H,N*W,C) transposes are extra HBM passes (the
    # dominant remaining cost for this mem-bound kernel); run the surrounding
    # model channels-last and call convdu_rows directly to make them free.
    x_rows = jnp.transpose(x_nchw.astype(io_dtype), (2, 0, 3, 1)).reshape(h, n * w, c)
    out_rows = convdu_rows(x_rows, w_t, bias, alpha, out_dtype=out_dtype)
    return jnp.transpose(out_rows.reshape(h, n, w, c), (1, 3, 0, 2))


def convdu_reference(x_nchw, weight, bias, alpha,
                     matmul_dtype=jnp.float32, io_dtype=jnp.float32):
    """Pure-JAX reference mirroring the PyTorch forward.  matmul_dtype /
    io_dtype = bf16 emulate the kernel's bf16 matmul-input / HBM rounding."""
    n, c, h, w = x_nchw.shape
    kh = weight.shape[2]
    wc = weight[:, :, (kh - 1) // 2, 0].astype(matmul_dtype).astype(jnp.float32)
    x = x_nchw.astype(io_dtype).astype(jnp.float32)

    def conv_prelu(s):  # s: (N, C, W)
        s_m = s.astype(matmul_dtype).astype(jnp.float32)
        y = jnp.einsum('oc,ncw->now', wc, s_m,
                       precision=lax.Precision.HIGHEST) + bias[None, :, None]
        return jnp.where(y > 0, y, alpha * y)

    rows = [x[:, :, i, :] for i in range(h)]
    stack = [rows[0]]
    for i in range(1, h):
        stack.append(conv_prelu(stack[i - 1]) + rows[i])
    for pos in range(h - 2, -1, -1):
        stack[pos] = conv_prelu(stack[pos + 1]) + stack[pos]
    return jnp.stack(stack, axis=2)


if __name__ == "__main__":
    key = jax.random.PRNGKey(0)
    k_x, k_w, k_b, k_x2 = jax.random.split(key, 4)

    # ---- small-H case (fully unrolled scan path) ----
    N, C, H, W = 2, 128, 8, 16
    KH = 9
    x = jax.random.normal(k_x, (N, C, H, W), dtype=jnp.float32)
    weight = 0.03 * jax.random.normal(k_w, (C, C, KH, 1), dtype=jnp.float32)
    bias = 0.1 * jax.random.normal(k_b, (C,), dtype=jnp.float32)
    alpha = jnp.float32(0.25)            # nn.PReLU() default init

    out = jax.block_until_ready(convdu_pallas(x, weight, bias, alpha))

    # Tight check vs a reference applying the same bf16 input/matmul rounding ...
    ref_bf16 = convdu_reference(x, weight, bias, alpha,
                                matmul_dtype=jnp.bfloat16, io_dtype=jnp.bfloat16)
    np.testing.assert_allclose(np.asarray(out), np.asarray(ref_bf16),
                               rtol=1e-2, atol=1e-2)
    # ... and a loose check vs the full-f32 PyTorch-faithful reference
    # (bf16 rounding compounds over the 2H-1 chained matmuls; keep the
    # io_dtype=out_dtype=f32 path as the documented high-precision fallback).
    ref_f32 = convdu_reference(x, weight, bias, alpha)
    np.testing.assert_allclose(np.asarray(out), np.asarray(ref_f32),
                               rtol=1e-1, atol=1e-1)

    # ---- larger-H case (exercises the lax.fori_loop scan path) ----
    N2, H2, W2 = 1, 24, 16
    x2 = jax.random.normal(k_x2, (N2, C, H2, W2), dtype=jnp.float32)
    out2 = jax.block_until_ready(convdu_pallas(x2, weight, bias, alpha))
    ref2 = convdu_reference(x2, weight, bias, alpha,
                            matmul_dtype=jnp.bfloat16, io_dtype=jnp.bfloat16)
    np.testing.assert_allclose(np.asarray(out2), np.asarray(ref2),
                               rtol=2e-2, atol=2e-2)

    print("KERNEL_OK")
</pallas_src>

<mosaic_0001>
module attributes {stable_mosaic.version = 11 : i64} {
  func.func @convdu_kernel(%arg0: i32, %arg1: memref<8x32x128xbf16, #tpu.memory_space<vmem>>, %arg2: memref<128x128xbf16, #tpu.memory_space<vmem>>, %arg3: memref<1x128xf32, #tpu.memory_space<vmem>>, %arg4: memref<1xf32, #tpu.memory_space<smem>>, %arg5: memref<8x32x128xf32, #tpu.memory_space<vmem>>) attributes {dimension_semantics = [#tpu.dimension_semantics<parallel>], iteration_bounds = array<i64: 1>, scalar_prefetch = 0 : i64, scratch_operands = 0 : i64, tpu.core_type = #tpu.core_type<tc>, window_params = [{transform_indices = @transform_0, window_bounds = array<i64: 8, 32, 128>}, {pipeline_mode = #tpu.pipeline_mode<synchronous>, transform_indices = @transform_1, window_bounds = array<i64: 128, 128>}, {pipeline_mode = #tpu.pipeline_mode<synchronous>, transform_indices = @transform_2, window_bounds = array<i64: 1, 128>}, {transform_indices = @transform_3, window_bounds = array<i64: 1>}, {transform_indices = @transform_4, window_bounds = array<i64: 8, 32, 128>}]} {
    %c0 = arith.constant 0 : index
    %0 = memref.load %arg4[%c0] : memref<1xf32, #tpu.memory_space<smem>>
    %c0_0 = arith.constant 0 : index
    %c0_1 = arith.constant 0 : index
    %1 = vector.load %arg2[%c0_0, %c0_1] : memref<128x128xbf16, #tpu.memory_space<vmem>>, vector<128x128xbf16>
    %c0_2 = arith.constant 0 : index
    %c0_3 = arith.constant 0 : index
    %2 = vector.load %arg3[%c0_2, %c0_3] : memref<1x128xf32, #tpu.memory_space<vmem>>, vector<1x128xf32>
    %c0_4 = arith.constant 0 : index
    %c0_5 = arith.constant 0 : index
    %c0_6 = arith.constant 0 : index
    %3 = vector.load %arg1[%c0_4, %c0_5, %c0_6] : memref<8x32x128xbf16, #tpu.memory_space<vmem>>, vector<1x32x128xbf16>
    %4 = vector.shape_cast %3 : vector<1x32x128xbf16> to vector<32x128xbf16>
    %5 = arith.extf %4 : vector<32x128xbf16> to vector<32x128xf32>
    %c0_7 = arith.constant 0 : index
    %c0_8 = arith.constant 0 : index
    %c0_9 = arith.constant 0 : index
    %6 = vector.load %arg5[%c0_7, %c0_8, %c0_9] : memref<8x32x128xf32, #tpu.memory_space<vmem>>, vector<1x32x128xf32>
    %7 = vector.shape_cast %6 : vector<1x32x128xf32> to vector<32x128xf32>
    %8 = vector.shape_cast %5 : vector<32x128xf32> to vector<1x32x128xf32>
    tpu.vector_store %arg5[%c0_7, %c0_8, %c0_9], %8 {strides = array<i32>} : memref<8x32x128xf32, #tpu.memory_space<vmem>>, vector<1x32x128xf32>,
    %c1 = arith.constant 1 : index
    %c0_10 = arith.constant 0 : index
    %c0_11 = arith.constant 0 : index
    %9 = vector.load %arg1[%c1, %c0_10, %c0_11] : memref<8x32x128xbf16, #tpu.memory_space<vmem>>, vector<1x32x128xbf16>
    %10 = vector.shape_cast %9 : vector<1x32x128xbf16> to vector<32x128xbf16>
    %11 = arith.extf %10 : vector<32x128xbf16> to vector<32x128xf32>
    %cst = arith.constant dense<0.000000e+00> : vector<32x128xf32>
    %12 = tpu.matmul %4, %1, %cst {dimension_numbers = #tpu.dot_dimension_numbers<[1], [0], [0], [1], [0, 0, 1, 1], [], []>} : vector<32x128xbf16>, vector<128x128xbf16>, vector<32x128xf32> -> vector<32x128xf32>
    %13 = vector.broadcast %2 : vector<1x128xf32> to vector<32x128xf32>
    %14 = arith.addf %12, %13 : vector<32x128xf32>
    %cst_12 = arith.constant 0.000000e+00 : f32
    %15 = vector.broadcast %cst_12 : f32 to vector<32x128xf32>
    %16 = arith.cmpf ogt, %14, %15 : vector<32x128xf32>
    %17 = vector.broadcast %0 : f32 to vector<32x128xf32>
    %18 = arith.mulf %17, %14 : vector<32x128xf32>
    %19 = arith.select %16, %14, %18 : vector<32x128xi1>, vector<32x128xf32>
    %20 = arith.addf %19, %11 : vector<32x128xf32>
    %c1_13 = arith.constant 1 : index
    %c0_14 = arith.constant 0 : index
    %c0_15 = arith.constant 0 : index
    %21 = vector.load %arg5[%c1_13, %c0_14, %c0_15] : memref<8x32x128xf32, #tpu.memory_space<vmem>>, vector<1x32x128xf32>
    %22 = vector.shape_cast %21 : vector<1x32x128xf32> to vector<32x128xf32>
    %23 = vector.shape_cast %20 : vector<32x128xf32> to vector<1x32x128xf32>
    tpu.vector_store %arg5[%c1_13, %c0_14, %c0_15], %23 {strides = array<i32>} : memref<8x32x128xf32, #tpu.memory_space<vmem>>, vector<1x32x128xf32>,
    %24 = arith.truncf %20 : vector<32x128xf32> to vector<32x128xbf16>
    %c2 = arith.constant 2 : index
    %c0_16 = arith.constant 0 : index
    %c0_17 = arith.constant 0 : index
    %25 = vector.load %arg1[%c2, %c0_16, %c0_17] : memref<8x32x128xbf16, #tpu.memory_space<vmem>>, vector<1x32x128xbf16>
    %26 = vector.shape_cast %25 : vector<1x32x128xbf16> to vector<32x128xbf16>
    %27 = arith.extf %26 : vector<32x128xbf16> to vector<32x128xf32>
    %cst_18 = arith.constant dense<0.000000e+00> : vector<32x128xf32>
    %28 = tpu.matmul %24, %1, %cst_18 {dimension_numbers = #tpu.dot_dimension_numbers<[1], [0], [0], [1], [0, 0, 1, 1], [], []>} : vector<32x128xbf16>, vector<128x128xbf16>, vector<32x128xf32> -> vector<32x128xf32>
    %29 = vector.broadcast %2 : vector<1x128xf32> to vector<32x128xf32>
    %30 = arith.addf %28, %29 : vector<32x128xf32>
    %cst_19 = arith.constant 0.000000e+00 : f32
    %31 = vector.broadcast %cst_19 : f32 to vector<32x128xf32>
    %32 = arith.cmpf ogt, %30, %31 : vector<32x128xf32>
    %33 = vector.broadcast %0 : f32 to vector<32x128xf32>
    %34 = arith.mulf %33, %30 : vector<32x128xf32>
    %35 = arith.select %32, %30, %34 : vector<32x128xi1>, vector<32x128xf32>
    %36 = arith.addf %35, %27 : vector<32x128xf32>
    %c2_20 = arith.constant 2 : index
    %c0_21 = arith.constant 0 : index
    %c0_22 = arith.constant 0 : index
    %37 = vector.load %arg5[%c2_20, %c0_21, %c0_22] : memref<8x32x128xf32, #tpu.memory_space<vmem>>, vector<1x32x128xf32>
    %38 = vector.shape_cast %37 : vector<1x32x128xf32> to vector<32x128xf32>
    %39 = vector.shape_cast %36 : vector<32x128xf32> to vector<1x32x128xf32>
    tpu.vector_store %arg5[%c2_20, %c0_21, %c0_22], %39 {strides = array<i32>} : memref<8x32x128xf32, #tpu.memory_space<vmem>>, vector<1x32x128xf32>,
    %40 = arith.truncf %36 : vector<32x128xf32> to vector<32x128xbf16>
    %c3 = arith.constant 3 : index
    %c0_23 = arith.constant 0 : index
    %c0_24 = arith.constant 0 : index
    %41 = vector.load %arg1[%c3, %c0_23, %c0_24] : memref<8x32x128xbf16, #tpu.memory_space<vmem>>, vector<1x32x128xbf16>
    %42 = vector.shape_cast %41 : vector<1x32x128xbf16> to vector<32x128xbf16>
    %43 = arith.extf %42 : vector<32x128xbf16> to vector<32x128xf32>
    %cst_25 = arith.constant dense<0.000000e+00> : vector<32x128xf32>
    %44 = tpu.matmul %40, %1, %cst_25 {dimension_numbers = #tpu.dot_dimension_numbers<[1], [0], [0], [1], [0, 0, 1, 1], [], []>} : vector<32x128xbf16>, vector<128x128xbf16>, vector<32x128xf32> -> vector<32x128xf32>
    %45 = vector.broadcast %2 : vector<1x128xf32> to vector<32x128xf32>
    %46 = arith.addf %44, %45 : vector<32x128xf32>
    %cst_26 = arith.constant 0.000000e+00 : f32
    %47 = vector.broadcast %cst_26 : f32 to vector<32x128xf32>
    %48 = arith.cmpf ogt, %46, %47 : vector<32x128xf32>
    %49 = vector.broadcast %0 : f32 to vector<32x128xf32>
    %50 = arith.mulf %49, %46 : vector<32x128xf32>
    %51 = arith.select %48, %46, %50 : vector<32x128xi1>, vector<32x128xf32>
    %52 = arith.addf %51, %43 : vector<32x128xf32>
    %c3_27 = arith.constant 3 : index
    %c0_28 = arith.constant 0 : index
    %c0_29 = arith.constant 0 : index
    %53 = vector.load %arg5[%c3_27, %c0_28, %c0_29] : memref<8x32x128xf32, #tpu.memory_space<vmem>>, vector<1x32x128xf32>
    %54 = vector.shape_cast %53 : vector<1x32x128xf32> to vector<32x128xf32>
    %55 = vector.shape_cast %52 : vector<32x128xf32> to vector<1x32x128xf32>
    tpu.vector_store %arg5[%c3_27, %c0_28, %c0_29], %55 {strides = array<i32>} : memref<8x32x128xf32, #tpu.memory_space<vmem>>, vector<1x32x128xf32>,
    %56 = arith.truncf %52 : vector<32x128xf32> to vector<32x128xbf16>
    %c4 = arith.constant 4 : index
    %c0_30 = arith.constant 0 : index
    %c0_31 = arith.constant 0 : index
    %57 = vector.load %arg1[%c4, %c0_30, %c0_31] : memref<8x32x128xbf16, #tpu.memory_space<vmem>>, vector<1x32x128xbf16>
    %58 = vector.shape_cast %57 : vector<1x32x128xbf16> to vector<32x128xbf16>
    %59 = arith.extf %58 : vector<32x128xbf16> to vector<32x128xf32>
    %cst_32 = arith.constant dense<0.000000e+00> : vector<32x128xf32>
    %60 = tpu.matmul %56, %1, %cst_32 {dimension_numbers = #tpu.dot_dimension_numbers<[1], [0], [0], [1], [0, 0, 1, 1], [], []>} : vector<32x128xbf16>, vector<128x128xbf16>, vector<32x128xf32> -> vector<32x128xf32>
    %61 = vector.broadcast %2 : vector<1x128xf32> to vector<32x128xf32>
    %62 = arith.addf %60, %61 : vector<32x128xf32>
    %cst_33 = arith.constant 0.000000e+00 : f32
    %63 = vector.broadcast %cst_33 : f32 to vector<32x128xf32>
    %64 = arith.cmpf ogt, %62, %63 : vector<32x128xf32>
    %65 = vector.broadcast %0 : f32 to vector<32x128xf32>
    %66 = arith.mulf %65, %62 : vector<32x128xf32>
    %67 = arith.select %64, %62, %66 : vector<32x128xi1>, vector<32x128xf32>
    %68 = arith.addf %67, %59 : vector<32x128xf32>
    %c4_34 = arith.constant 4 : index
    %c0_35 = arith.constant 0 : index
    %c0_36 = arith.constant 0 : index
    %69 = vector.load %arg5[%c4_34, %c0_35, %c0_36] : memref<8x32x128xf32, #tpu.memory_space<vmem>>, vector<1x32x128xf32>
    %70 = vector.shape_cast %69 : vector<1x32x128xf32> to vector<32x128xf32>
    %71 = vector.shape_cast %68 : vector<32x128xf32> to vector<1x32x128xf32>
    tpu.vector_store %arg5[%c4_34, %c0_35, %c0_36], %71 {strides = array<i32>} : memref<8x32x128xf32, #tpu.memory_space<vmem>>, vector<1x32x128xf32>,
    %72 = arith.truncf %68 : vector<32x128xf32> to vector<32x128xbf16>
    %c5 = arith.constant 5 : index
    %c0_37 = arith.constant 0 : index
    %c0_38 = arith.constant 0 : index
    %73 = vector.load %arg1[%c5, %c0_37, %c0_38] : memref<8x32x128xbf16, #tpu.memory_space<vmem>>, vector<1x32x128xbf16>
    %74 = vector.shape_cast %73 : vector<1x32x128xbf16> to vector<32x128xbf16>
    %75 = arith.extf %74 : vector<32x128xbf16> to vector<32x128xf32>
    %cst_39 = arith.constant dense<0.000000e+00> : vector<32x128xf32>
    %76 = tpu.matmul %72, %1, %cst_39 {dimension_numbers = #tpu.dot_dimension_numbers<[1], [0], [0], [1], [0, 0, 1, 1], [], []>} : vector<32x128xbf16>, vector<128x128xbf16>, vector<32x128xf32> -> vector<32x128xf32>
    %77 = vector.broadcast %2 : vector<1x128xf32> to vector<32x128xf32>
    %78 = arith.addf %76, %77 : vector<32x128xf32>
    %cst_40 = arith.constant 0.000000e+00 : f32
    %79 = vector.broadcast %cst_40 : f32 to vector<32x128xf32>
    %80 = arith.cmpf ogt, %78, %79 : vector<32x128xf32>
    %81 = vector.broadcast %0 : f32 to vector<32x128xf32>
    %82 = arith.mulf %81, %78 : vector<32x128xf32>
    %83 = arith.select %80, %78, %82 : vector<32x128xi1>, vector<32x128xf32>
    %84 = arith.addf %83, %75 : vector<32x128xf32>
    %c5_41 = arith.constant 5 : index
    %c0_42 = arith.constant 0 : index
    %c0_43 = arith.constant 0 : index
    %85 = vector.load %arg5[%c5_41, %c0_42, %c0_43] : memref<8x32x128xf32, #tpu.memory_space<vmem>>, vector<1x32x128xf32>
    %86 = vector.shape_cast %85 : vector<1x32x128xf32> to vector<32x128xf32>
    %87 = vector.shape_cast %84 : vector<32x128xf32> to vector<1x32x128xf32>
    tpu.vector_store %arg5[%c5_41, %c0_42, %c0_43], %87 {strides = array<i32>} : memref<8x32x128xf32, #tpu.memory_space<vmem>>, vector<1x32x128xf32>,
    %88 = arith.truncf %84 : vector<32x128xf32> to vector<32x128xbf16>
    %c6 = arith.constant 6 : index
    %c0_44 = arith.constant 0 : index
    %c0_45 = arith.constant 0 : index
    %89 = vector.load %arg1[%c6, %c0_44, %c0_45] : memref<8x32x128xbf16, #tpu.memory_space<vmem>>, vector<1x32x128xbf16>
    %90 = vector.shape_cast %89 : vector<1x32x128xbf16> to vector<32x128xbf16>
    %91 = arith.extf %90 : vector<32x128xbf16> to vector<32x128xf32>
    %cst_46 = arith.constant dense<0.000000e+00> : vector<32x128xf32>
    %92 = tpu.matmul %88, %1, %cst_46 {dimension_numbers = #tpu.dot_dimension_numbers<[1], [0], [0], [1], [0, 0, 1, 1], [], []>} : vector<32x128xbf16>, vector<128x128xbf16>, vector<32x128xf32> -> vector<32x128xf32>
    %93 = vector.broadcast %2 : vector<1x128xf32> to vector<32x128xf32>
    %94 = arith.addf %92, %93 : vector<32x128xf32>
    %cst_47 = arith.constant 0.000000e+00 : f32
    %95 = vector.broadcast %cst_47 : f32 to vector<32x128xf32>
    %96 = arith.cmpf ogt, %94, %95 : vector<32x128xf32>
    %97 = vector.broadcast %0 : f32 to vector<32x128xf32>
    %98 = arith.mulf %97, %94 : vector<32x128xf32>
    %99 = arith.select %96, %94, %98 : vector<32x128xi1>, vector<32x128xf32>
    %100 = arith.addf %99, %91 : vector<32x128xf32>
    %c6_48 = arith.constant 6 : index
    %c0_49 = arith.constant 0 : index
    %c0_50 = arith.constant 0 : index
    %101 = vector.load %arg5[%c6_48, %c0_49, %c0_50] : memref<8x32x128xf32, #tpu.memory_space<vmem>>, vector<1x32x128xf32>
    %102 = vector.shape_cast %101 : vector<1x32x128xf32> to vector<32x128xf32>
    %103 = vector.shape_cast %100 : vector<32x128xf32> to vector<1x32x128xf32>
    tpu.vector_store %arg5[%c6_48, %c0_49, %c0_50], %103 {strides = array<i32>} : memref<8x32x128xf32, #tpu.memory_space<vmem>>, vector<1x32x128xf32>,
    %104 = arith.truncf %100 : vector<32x128xf32> to vector<32x128xbf16>
    %c7 = arith.constant 7 : index
    %c0_51 = arith.constant 0 : index
    %c0_52 = arith.constant 0 : index
    %105 = vector.load %arg1[%c7, %c0_51, %c0_52] : memref<8x32x128xbf16, #tpu.memory_space<vmem>>, vector<1x32x128xbf16>
    %106 = vector.shape_cast %105 : vector<1x32x128xbf16> to vector<32x128xbf16>
    %107 = arith.extf %106 : vector<32x128xbf16> to vector<32x128xf32>
    %cst_53 = arith.constant dense<0.000000e+00> : vector<32x128xf32>
    %108 = tpu.matmul %104, %1, %cst_53 {dimension_numbers = #tpu.dot_dimension_numbers<[1], [0], [0], [1], [0, 0, 1, 1], [], []>} : vector<32x128xbf16>, vector<128x128xbf16>, vector<32x128xf32> -> vector<32x128xf32>
    %109 = vector.broadcast %2 : vector<1x128xf32> to vector<32x128xf32>
    %110 = arith.addf %108, %109 : vector<32x128xf32>
    %cst_54 = arith.constant 0.000000e+00 : f32
    %111 = vector.broadcast %cst_54 : f32 to vector<32x128xf32>
    %112 = arith.cmpf ogt, %110, %111 : vector<32x128xf32>
    %113 = vector.broadcast %0 : f32 to vector<32x128xf32>
    %114 = arith.mulf %113, %110 : vector<32x128xf32>
    %115 = arith.select %112, %110, %114 : vector<32x128xi1>, vector<32x128xf32>
    %116 = arith.addf %115, %107 : vector<32x128xf32>
    %c7_55 = arith.constant 7 : index
    %c0_56 = arith.constant 0 : index
    %c0_57 = arith.constant 0 : index
    %117 = vector.load %arg5[%c7_55, %c0_56, %c0_57] : memref<8x32x128xf32, #tpu.memory_space<vmem>>, vector<1x32x128xf32>
    %118 = vector.shape_cast %117 : vector<1x32x128xf32> to vector<32x128xf32>
    %119 = vector.shape_cast %116 : vector<32x128xf32> to vector<1x32x128xf32>
    tpu.vector_store %arg5[%c7_55, %c0_56, %c0_57], %119 {strides = array<i32>} : memref<8x32x128xf32, #tpu.memory_space<vmem>>, vector<1x32x128xf32>,
    %120 = arith.truncf %116 : vector<32x128xf32> to vector<32x128xbf16>
    %c6_58 = arith.constant 6 : index
    %c0_59 = arith.constant 0 : index
    %c0_60 = arith.constant 0 : index
    %121 = vector.load %arg5[%c6_58, %c0_59, %c0_60] : memref<8x32x128xf32, #tpu.memory_space<vmem>>, vector<1x32x128xf32>
    %122 = vector.shape_cast %121 : vector<1x32x128xf32> to vector<32x128xf32>
    %cst_61 = arith.constant dense<0.000000e+00> : vector<32x128xf32>
    %123 = tpu.matmul %120, %1, %cst_61 {dimension_numbers = #tpu.dot_dimension_numbers<[1], [0], [0], [1], [0, 0, 1, 1], [], []>} : vector<32x128xbf16>, vector<128x128xbf16>, vector<32x128xf32> -> vector<32x128xf32>
    %124 = vector.broadcast %2 : vector<1x128xf32> to vector<32x128xf32>
    %125 = arith.addf %123, %124 : vector<32x128xf32>
    %cst_62 = arith.constant 0.000000e+00 : f32
    %126 = vector.broadcast %cst_62 : f32 to vector<32x128xf32>
    %127 = arith.cmpf ogt, %125, %126 : vector<32x128xf32>
    %128 = vector.broadcast %0 : f32 to vector<32x128xf32>
    %129 = arith.mulf %128, %125 : vector<32x128xf32>
    %130 = arith.select %127, %125, %129 : vector<32x128xi1>, vector<32x128xf32>
    %131 = arith.addf %130, %122 : vector<32x128xf32>
    %c6_63 = arith.constant 6 : index
    %c0_64 = arith.constant 0 : index
    %c0_65 = arith.constant 0 : index
    %132 = vector.load %arg5[%c6_63, %c0_64, %c0_65] : memref<8x32x128xf32, #tpu.memory_space<vmem>>, vector<1x32x128xf32>
    %133 = vector.shape_cast %132 : vector<1x32x128xf32> to vector<32x128xf32>
    %134 = vector.shape_cast %131 : vector<32x128xf32> to vector<1x32x128xf32>
    tpu.vector_store %arg5[%c6_63, %c0_64, %c0_65], %134 {strides = array<i32>} : memref<8x32x128xf32, #tpu.memory_space<vmem>>, vector<1x32x128xf32>,
    %135 = arith.truncf %131 : vector<32x128xf32> to vector<32x128xbf16>
    %c5_66 = arith.constant 5 : index
    %c0_67 = arith.constant 0 : index
    %c0_68 = arith.constant 0 : index
    %136 = vector.load %arg5[%c5_66, %c0_67, %c0_68] : memref<8x32x128xf32, #tpu.memory_space<vmem>>, vector<1x32x128xf32>
    %137 = vector.shape_cast %136 : vector<1x32x128xf32> to vector<32x128xf32>
    %cst_69 = arith.constant dense<0.000000e+00> : vector<32x128xf32>
    %138 = tpu.matmul %135, %1, %cst_69 {dimension_numbers = #tpu.dot_dimension_numbers<[1], [0], [0], [1], [0, 0, 1, 1], [], []>} : vector<32x128xbf16>, vector<128x128xbf16>, vector<32x128xf32> -> vector<32x128xf32>
    %139 = vector.broadcast %2 : vector<1x128xf32> to vector<32x128xf32>
    %140 = arith.addf %138, %139 : vector<32x128xf32>
    %cst_70 = arith.constant 0.000000e+00 : f32
    %141 = vector.broadcast %cst_70 : f32 to vector<32x128xf32>
    %142 = arith.cmpf ogt, %140, %141 : vector<32x128xf32>
    %143 = vector.broadcast %0 : f32 to vector<32x128xf32>
    %144 = arith.mulf %143, %140 : vector<32x128xf32>
    %145 = arith.select %142, %140, %144 : vector<32x128xi1>, vector<32x128xf32>
    %146 = arith.addf %145, %137 : vector<32x128xf32>
    %c5_71 = arith.constant 5 : index
    %c0_72 = arith.constant 0 : index
    %c0_73 = arith.constant 0 : index
    %147 = vector.load %arg5[%c5_71, %c0_72, %c0_73] : memref<8x32x128xf32, #tpu.memory_space<vmem>>, vector<1x32x128xf32>
    %148 = vector.shape_cast %147 : vector<1x32x128xf32> to vector<32x128xf32>
    %149 = vector.shape_cast %146 : vector<32x128xf32> to vector<1x32x128xf32>
    tpu.vector_store %arg5[%c5_71, %c0_72, %c0_73], %149 {strides = array<i32>} : memref<8x32x128xf32, #tpu.memory_space<vmem>>, vector<1x32x128xf32>,
    %150 = arith.truncf %146 : vector<32x128xf32> to vector<32x128xbf16>
    %c4_74 = arith.constant 4 : index
    %c0_75 = arith.constant 0 : index
    %c0_76 = arith.constant 0 : index
    %151 = vector.load %arg5[%c4_74, %c0_75, %c0_76] : memref<8x32x128xf32, #tpu.memory_space<vmem>>, vector<1x32x128xf32>
    %152 = vector.shape_cast %151 : vector<1x32x128xf32> to vector<32x128xf32>
    %cst_77 = arith.constant dense<0.000000e+00> : vector<32x128xf32>
    %153 = tpu.matmul %150, %1, %cst_77 {dimension_numbers = #tpu.dot_dimension_numbers<[1], [0], [0], [1], [0, 0, 1, 1], [], []>} : vector<32x128xbf16>, vector<128x128xbf16>, vector<32x128xf32> -> vector<32x128xf32>
    %154 = vector.broadcast %2 : vector<1x128xf32> to vector<32x128xf32>
    %155 = arith.addf %153, %154 : vector<32x128xf32>
    %cst_78 = arith.constant 0.000000e+00 : f32
    %156 = vector.broadcast %cst_78 : f32 to vector<32x128xf32>
    %157 = arith.cmpf ogt, %155, %156 : vector<32x128xf32>
    %158 = vector.broadcast %0 : f32 to vector<32x128xf32>
    %159 = arith.mulf %158, %155 : vector<32x128xf32>
    %160 = arith.select %157, %155, %159 : vector<32x128xi1>, vector<32x128xf32>
    %161 = arith.addf %160, %152 : vector<32x128xf32>
    %c4_79 = arith.constant 4 : index
    %c0_80 = arith.constant 0 : index
    %c0_81 = arith.constant 0 : index
    %162 = vector.load %arg5[%c4_79, %c0_80, %c0_81] : memref<8x32x128xf32, #tpu.memory_space<vmem>>, vector<1x32x128xf32>
    %163 = vector.shape_cast %162 : vector<1x32x128xf32> to vector<32x128xf32>
    %164 = vector.shape_cast %161 : vector<32x128xf32> to vector<1x32x128xf32>
    tpu.vector_store %arg5[%c4_79, %c0_80, %c0_81], %164 {strides = array<i32>} : memref<8x32x128xf32, #tpu.memory_space<vmem>>, vector<1x32x128xf32>,
    %165 = arith.truncf %161 : vector<32x128xf32> to vector<32x128xbf16>
    %c3_82 = arith.constant 3 : index
    %c0_83 = arith.constant 0 : index
    %c0_84 = arith.constant 0 : index
    %166 = vector.load %arg5[%c3_82, %c0_83, %c0_84] : memref<8x32x128xf32, #tpu.memory_space<vmem>>, vector<1x32x128xf32>
    %167 = vector.shape_cast %166 : vector<1x32x128xf32> to vector<32x128xf32>
    %cst_85 = arith.constant dense<0.000000e+00> : vector<32x128xf32>
    %168 = tpu.matmul %165, %1, %cst_85 {dimension_numbers = #tpu.dot_dimension_numbers<[1], [0], [0], [1], [0, 0, 1, 1], [], []>} : vector<32x128xbf16>, vector<128x128xbf16>, vector<32x128xf32> -> vector<32x128xf32>
    %169 = vector.broadcast %2 : vector<1x128xf32> to vector<32x128xf32>
    %170 = arith.addf %168, %169 : vector<32x128xf32>
    %cst_86 = arith.constant 0.000000e+00 : f32
    %171 = vector.broadcast %cst_86 : f32 to vector<32x128xf32>
    %172 = arith.cmpf ogt, %170, %171 : vector<32x128xf32>
    %173 = vector.broadcast %0 : f32 to vector<32x128xf32>
    %174 = arith.mulf %173, %170 : vector<32x128xf32>
    %175 = arith.select %172, %170, %174 : vector<32x128xi1>, vector<32x128xf32>
    %176 = arith.addf %175, %167 : vector<32x128xf32>
    %c3_87 = arith.constant 3 : index
    %c0_88 = arith.constant 0 : index
    %c0_89 = arith.constant 0 : index
    %177 = vector.load %arg5[%c3_87, %c0_88, %c0_89] : memref<8x32x128xf32, #tpu.memory_space<vmem>>, vector<1x32x128xf32>
    %178 = vector.shape_cast %177 : vector<1x32x128xf32> to vector<32x128xf32>
    %179 = vector.shape_cast %176 : vector<32x128xf32> to vector<1x32x128xf32>
    tpu.vector_store %arg5[%c3_87, %c0_88, %c0_89], %179 {strides = array<i32>} : memref<8x32x128xf32, #tpu.memory_space<vmem>>, vector<1x32x128xf32>,
    %180 = arith.truncf %176 : vector<32x128xf32> to vector<32x128xbf16>
    %c2_90 = arith.constant 2 : index
    %c0_91 = arith.constant 0 : index
    %c0_92 = arith.constant 0 : index
    %181 = vector.load %arg5[%c2_90, %c0_91, %c0_92] : memref<8x32x128xf32, #tpu.memory_space<vmem>>, vector<1x32x128xf32>
    %182 = vector.shape_cast %181 : vector<1x32x128xf32> to vector<32x128xf32>
    %cst_93 = arith.constant dense<0.000000e+00> : vector<32x128xf32>
    %183 = tpu.matmul %180, %1, %cst_93 {dimension_numbers = #tpu.dot_dimension_numbers<[1], [0], [0], [1], [0, 0, 1, 1], [], []>} : vector<32x128xbf16>, vector<128x128xbf16>, vector<32x128xf32> -> vector<32x128xf32>
    %184 = vector.broadcast %2 : vector<1x128xf32> to vector<32x128xf32>
    %185 = arith.addf %183, %184 : vector<32x128xf32>
    %cst_94 = arith.constant 0.000000e+00 : f32
    %186 = vector.broadcast %cst_94 : f32 to vector<32x128xf32>
    %187 = arith.cmpf ogt, %185, %186 : vector<32x128xf32>
    %188 = vector.broadcast %0 : f32 to vector<32x128xf32>
    %189 = arith.mulf %188, %185 : vector<32x128xf32>
    %190 = arith.select %187, %185, %189 : vector<32x128xi1>, vector<32x128xf32>
    %191 = arith.addf %190, %182 : vector<32x128xf32>
    %c2_95 = arith.constant 2 : index
    %c0_96 = arith.constant 0 : index
    %c0_97 = arith.constant 0 : index
    %192 = vector.load %arg5[%c2_95, %c0_96, %c0_97] : memref<8x32x128xf32, #tpu.memory_space<vmem>>, vector<1x32x128xf32>
    %193 = vector.shape_cast %192 : vector<1x32x128xf32> to vector<32x128xf32>
    %194 = vector.shape_cast %191 : vector<32x128xf32> to vector<1x32x128xf32>
    tpu.vector_store %arg5[%c2_95, %c0_96, %c0_97], %194 {strides = array<i32>} : memref<8x32x128xf32, #tpu.memory_space<vmem>>, vector<1x32x128xf32>,
    %195 = arith.truncf %191 : vector<32x128xf32> to vector<32x128xbf16>
    %c1_98 = arith.constant 1 : index
    %c0_99 = arith.constant 0 : index
    %c0_100 = arith.constant 0 : index
    %196 = vector.load %arg5[%c1_98, %c0_99, %c0_100] : memref<8x32x128xf32, #tpu.memory_space<vmem>>, vector<1x32x128xf32>
    %197 = vector.shape_cast %196 : vector<1x32x128xf32> to vector<32x128xf32>
    %cst_101 = arith.constant dense<0.000000e+00> : vector<32x128xf32>
    %198 = tpu.matmul %195, %1, %cst_101 {dimension_numbers = #tpu.dot_dimension_numbers<[1], [0], [0], [1], [0, 0, 1, 1], [], []>} : vector<32x128xbf16>, vector<128x128xbf16>, vector<32x128xf32> -> vector<32x128xf32>
    %199 = vector.broadcast %2 : vector<1x128xf32> to vector<32x128xf32>
    %200 = arith.addf %198, %199 : vector<32x128xf32>
    %cst_102 = arith.constant 0.000000e+00 : f32
    %201 = vector.broadcast %cst_102 : f32 to vector<32x128xf32>
    %202 = arith.cmpf ogt, %200, %201 : vector<32x128xf32>
    %203 = vector.broadcast %0 : f32 to vector<32x128xf32>
    %204 = arith.mulf %203, %200 : vector<32x128xf32>
    %205 = arith.select %202, %200, %204 : vector<32x128xi1>, vector<32x128xf32>
    %206 = arith.addf %205, %197 : vector<32x128xf32>
    %c1_103 = arith.constant 1 : index
    %c0_104 = arith.constant 0 : index
    %c0_105 = arith.constant 0 : index
    %207 = vector.load %arg5[%c1_103, %c0_104, %c0_105] : memref<8x32x128xf32, #tpu.memory_space<vmem>>, vector<1x32x128xf32>
    %208 = vector.shape_cast %207 : vector<1x32x128xf32> to vector<32x128xf32>
    %209 = vector.shape_cast %206 : vector<32x128xf32> to vector<1x32x128xf32>
    tpu.vector_store %arg5[%c1_103, %c0_104, %c0_105], %209 {strides = array<i32>} : memref<8x32x128xf32, #tpu.memory_space<vmem>>, vector<1x32x128xf32>,
    %210 = arith.truncf %206 : vector<32x128xf32> to vector<32x128xbf16>
    %c0_106 = arith.constant 0 : index
    %c0_107 = arith.constant 0 : index
    %c0_108 = arith.constant 0 : index
    %211 = vector.load %arg5[%c0_106, %c0_107, %c0_108] : memref<8x32x128xf32, #tpu.memory_space<vmem>>, vector<1x32x128xf32>
    %212 = vector.shape_cast %211 : vector<1x32x128xf32> to vector<32x128xf32>
    %cst_109 = arith.constant dense<0.000000e+00> : vector<32x128xf32>
    %213 = tpu.matmul %210, %1, %cst_109 {dimension_numbers = #tpu.dot_dimension_numbers<[1], [0], [0], [1], [0, 0, 1, 1], [], []>} : vector<32x128xbf16>, vector<128x128xbf16>, vector<32x128xf32> -> vector<32x128xf32>
    %214 = vector.broadcast %2 : vector<1x128xf32> to vector<32x128xf32>
    %215 = arith.addf %213, %214 : vector<32x128xf32>
    %cst_110 = arith.constant 0.000000e+00 : f32
    %216 = vector.broadcast %cst_110 : f32 to vector<32x128xf32>
    %217 = arith.cmpf ogt, %215, %216 : vector<32x128xf32>
    %218 = vector.broadcast %0 : f32 to vector<32x128xf32>
    %219 = arith.mulf %218, %215 : vector<32x128xf32>
    %220 = arith.select %217, %215, %219 : vector<32x128xi1>, vector<32x128xf32>
    %221 = arith.addf %220, %212 : vector<32x128xf32>
    %c0_111 = arith.constant 0 : index
    %c0_112 = arith.constant 0 : index
    %c0_113 = arith.constant 0 : index
    %222 = vector.load %arg5[%c0_111, %c0_112, %c0_113] : memref<8x32x128xf32, #tpu.memory_space<vmem>>, vector<1x32x128xf32>
    %223 = vector.shape_cast %222 : vector<1x32x128xf32> to vector<32x128xf32>
    %224 = vector.shape_cast %221 : vector<32x128xf32> to vector<1x32x128xf32>
    tpu.vector_store %arg5[%c0_111, %c0_112, %c0_113], %224 {strides = array<i32>} : memref<8x32x128xf32, #tpu.memory_space<vmem>>, vector<1x32x128xf32>,
    return
  }
  func.func @transform_0(%arg0: i32) -> (i32, i32, i32) {
    %c0_i32 = arith.constant 0 : i32
    %c0_i32_0 = arith.constant 0 : i32
    %c0_i32_1 = arith.constant 0 : i32
    return %c0_i32, %arg0, %c0_i32_0 : i32, i32, i32
  }
  func.func @transform_1(%arg0: i32) -> (i32, i32) {
    %c0_i32 = arith.constant 0 : i32
    %c0_i32_0 = arith.constant 0 : i32
    %c0_i32_1 = arith.constant 0 : i32
    return %c0_i32, %c0_i32_0 : i32, i32
  }
  func.func @transform_2(%arg0: i32) -> (i32, i32) {
    %c0_i32 = arith.constant 0 : i32
    %c0_i32_0 = arith.constant 0 : i32
    %c0_i32_1 = arith.constant 0 : i32
    return %c0_i32, %c0_i32_0 : i32, i32
  }
  func.func @transform_3(%arg0: i32) -> i32 {
    %c0_i32 = arith.constant 0 : i32
    %c0_i32_0 = arith.constant 0 : i32
    return %c0_i32 : i32
  }
  func.func @transform_4(%arg0: i32) -> (i32, i32, i32) {
    %c0_i32 = arith.constant 0 : i32
    %c0_i32_0 = arith.constant 0 : i32
    %c0_i32_1 = arith.constant 0 : i32
    return %c0_i32, %arg0, %c0_i32_0 : i32, i32, i32
  }
}

</mosaic_0001>

<llo_original>
// kernel: convdu_pallas.1
$region0: #{convdu_pallas.1}
  #allocation0 [shape = 'u32[]', space=smem, size = 0x4, offset = 0x4, fixed_abs, tag = 'smem constant byte address 0x4 - core index']
  #allocation1 [shape = 'u32[72,128]{1,0:T(1,128)}', space=vmem, size = 0x9000, scoped, tag = 'internal scratch']
  #allocation2 [shape = 'f32[1]{0:T(128)S(6)}', space=smem, size = 0x200, scoped, tag = 'scoped memory for convdu_pallas.1']
  %s0 = inlined_call_operand.vmem [shape: bf16[8,32,128], index: 0, kind: input, shape index: {}]
  %s1 = inlined_call_operand.vmem [shape: bf16[128,128], index: 1, kind: input, shape index: {}]
  %s2 = inlined_call_operand.vmem [shape: f32[1,128], index: 2, kind: input, shape index: {}]
  %s3 = inlined_call_operand.<no memory space> [shape: f32[1], index: 3, kind: input, shape index: {}]
  %s4 = inlined_call_operand.vmem [shape: f32[8,32,128], index: 4, kind: output, shape index: {}]
  %s5 = sld [smem:[#allocation0]]
  $region26: #{convdu_pallas.1} parent=0
    _
  %s7 = ssub.s32 1, %s5
  %s8 = scalar_select 0, %s7, %s5
  %9 = sst [smem:[#allocation2]] %s3
  // Predicated region
  $region2: #{convdu_pallas.1} parent=0 // pred_check
    _
  $region3: #{convdu_pallas.1} parent=0 // pred_check_branch
    %11 = sbr.rel (0) target = $region5
  $region4: #{convdu_pallas.1} parent=0 // pred_region
    _
  $region5: #{convdu_pallas.1} parent=0 // pred_fallthru
    _
  // Predicated region
  $region6: #{convdu_pallas.1} parent=0 // pred_check
    _
  $region7: #{convdu_pallas.1} parent=0 // pred_check_branch
    %13 = sbr.rel (0) target = $region9
  $region8: #{convdu_pallas.1} parent=0 // pred_region
    _
  $region9: #{convdu_pallas.1} parent=0 // pred_fallthru
    _
  // Predicated region
  $region10: #{convdu_pallas.1} parent=0 // pred_check
    _
  $region11: #{convdu_pallas.1} parent=0 // pred_check_branch
    %15 = sbr.rel (0) target = $region13
  $region12: #{convdu_pallas.1} parent=0 // pred_region
    _
  $region13: #{convdu_pallas.1} parent=0 // pred_fallthru
    _
  // Predicated region
  $region14: #{convdu_pallas.1} parent=0 // pred_check
    _
  $region15: #{convdu_pallas.1} parent=0 // pred_check_branch
    %17 = sbr.rel (0) target = $region17
  $region16: #{convdu_pallas.1} parent=0 // pred_region
    _
  $region17: #{convdu_pallas.1} parent=0 // pred_fallthru
    _
  %s18 = sld [smem:[#allocation2]]
  %v19 = vld [vmem:[%s1] sm:$0xf]
  %v20 = vld [vmem:[%s1 + $0x4] sm:$0xf]
  %v21 = vld [vmem:[%s1 + $0x8] sm:$0xf]
  %v22 = vld [vmem:[%s1 + $0xc] sm:$0xf]
  %v23 = vld [vmem:[%s1 + $0x10] sm:$0xf]
  %v24 = vld [vmem:[%s1 + $0x14] sm:$0xf]
  %v25 = vld [vmem:[%s1 + $0x18] sm:$0xf]
  %v26 = vld [vmem:[%s1 + $0x1c] sm:$0xf]
  %v27 = vld [vmem:[%s1 + $0x20] sm:$0xf]
  %v28 = vld [vmem:[%s1 + $0x24] sm:$0xf]
  %v29 = vld [vmem:[%s1 + $0x28] sm:$0xf]
  %v30 = vld [vmem:[%s1 + $0x2c] sm:$0xf]
  %v31 = vld [vmem:[%s1 + $0x30] sm:$0xf]
  %v32 = vld [vmem:[%s1 + $0x34] sm:$0xf]
  %v33 = vld [vmem:[%s1 + $0x38] sm:$0xf]
  %v34 = vld [vmem:[%s1 + $0x3c] sm:$0xf]
  %v35 = vld [vmem:[%s2] sm:$0x1]
  %v36 = vld [vmem:[%s0] sm:$0xf]
  %v37 = vld [vmem:[%s0 + $0x4] sm:$0xf]
  %v38 = vld [vmem:[%s0 + $0x8] sm:$0xf]
  %v39 = vld [vmem:[%s0 + $0xc] sm:$0xf]
  %v40 = vunpack.c.l.bf16 %v36
  %v41 = vunpack.c.l.bf16 %v37
  %v42 = vunpack.c.l.bf16 %v38
  %v43 = vunpack.c.l.bf16 %v39
  %44 = vst [vmem:[%s4] sm:$0xff] %v40
  %45 = vst [vmem:[%s4 + $0x8] sm:$0xff] %v41
  %46 = vst [vmem:[%s4 + $0x10] sm:$0xff] %v42
  %47 = vst [vmem:[%s4 + $0x18] sm:$0xff] %v43
  %s48 = scalar_lea.vmem %s0, 16
  %v49 = vld [vmem:[%s48] sm:$0xf]
  %v50 = vld [vmem:[%s48 + $0x4] sm:$0xf]
  %v51 = vld [vmem:[%s48 + $0x8] sm:$0xf]
  %v52 = vld [vmem:[%s48 + $0xc] sm:$0xf]
  %v53 = vunpack.c.l.bf16 %v49
  %v54 = vunpack.c.l.bf16 %v50
  %v55 = vunpack.c.l.bf16 %v51
  %v56 = vunpack.c.l.bf16 %v52
  %v58 = vperm.slane %v35, 0
  %v64 = vunpack.c.l.b16 %v36
  %v65 = vunpack.c.l.b16 %v37
  %v66 = vunpack.c.l.b16 %v38
  %v67 = vunpack.c.l.b16 %v39
  %v68 = vpack.c.b16 %v65, %v64
  %v69 = vpack.c.b16 %v67, %v66
  %v88 = vunpack.c.l.b16 %v19
  %v89 = vunpack.c.l.b16 %v20
  %v90 = vunpack.c.l.b16 %v21
  %v91 = vunpack.c.l.b16 %v22
  %v92 = vunpack.c.l.b16 %v23
  %v93 = vunpack.c.l.b16 %v24
  %v94 = vunpack.c.l.b16 %v25
  %v95 = vunpack.c.l.b16 %v26
  %v96 = vunpack.c.l.b16 %v27
  %v97 = vunpack.c.l.b16 %v28
  %v98 = vunpack.c.l.b16 %v29
  %v99 = vunpack.c.l.b16 %v30
  %v100 = vunpack.c.l.b16 %v31
  %v101 = vunpack.c.l.b16 %v32
  %v102 = vunpack.c.l.b16 %v33
  %v103 = vunpack.c.l.b16 %v34
  %v104 = vpack.c.b16 %v89, %v88
  %v105 = vpack.c.b16 %v91, %v90
  %v106 = vpack.c.b16 %v93, %v92
  %v107 = vpack.c.b16 %v95, %v94
  %v108 = vpack.c.b16 %v97, %v96
  %v109 = vpack.c.b16 %v99, %v98
  %v110 = vpack.c.b16 %v101, %v100
  %v111 = vpack.c.b16 %v103, %v102
  %120 = vmatpush.bf16.msra.mxu0 %v111
  %121 = vmatpush.bf16.msra.mxu0 %v110
  %122 = vmatpush.bf16.msra.mxu0 %v109
  %123 = vmatpush.bf16.msra.mxu0 %v108
  %124 = vmatpush.bf16.msra.mxu0 %v107
  %125 = vmatpush.bf16.msra.mxu0 %v106
  %126 = vmatpush.bf16.msra.mxu0 %v105
  %127 = vmatpush.bf16.msra.mxu0 %v104
  %128 = vmatmul.bf16.gmra.mxu0 %v68
  %v129 = vpop.f32.mrf.mxu0
  %v130 = vadd.f32 %v58, %v129
  %v131 = vpop.f32.mrf.mxu0
  %v132 = vadd.f32 %v58, %v131
  %133 = vmatmul.bf16.gmra.mxu0 %v69
  %v134 = vpop.f32.mrf.mxu0
  %v135 = vadd.f32 %v58, %v134
  %v136 = vpop.f32.mrf.mxu0
  %v137 = vadd.f32 %v58, %v136
  %138 = vdwg.mxu0
  %vm139 = vcmp.gt.f32.partialorder %v130, 0.0
  %vm140 = vcmp.gt.f32.partialorder %v132, 0.0
  %vm141 = vcmp.gt.f32.partialorder %v135, 0.0
  %vm142 = vcmp.gt.f32.partialorder %v137, 0.0
  %v143 = vstv %s18
  %v144 = vmul.f32 %v143, %v130
  %v145 = vmul.f32 %v143, %v132
  %v146 = vmul.f32 %v143, %v135
  %v147 = vmul.f32 %v143, %v137
  %v148 = vsel %vm139, %v130, %v144
  %v149 = vsel %vm140, %v132, %v145
  %v150 = vsel %vm141, %v135, %v146
  %v151 = vsel %vm142, %v137, %v147
  %v152 = vadd.f32 %v148, %v53
  %v153 = vadd.f32 %v149, %v54
  %v154 = vadd.f32 %v150, %v55
  %v155 = vadd.f32 %v151, %v56
  %s156 = scalar_lea.vmem %s4, 32
  %157 = vst [vmem:[%s156] sm:$0xff] %v152
  %158 = vst [vmem:[%s156 + $0x8] sm:$0xff] %v153
  %159 = vst [vmem:[%s156 + $0x10] sm:$0xff] %v154
  %160 = vst [vmem:[%s156 + $0x18] sm:$0xff] %v155
  %v161 = vpack.c.bf16 %v153, %v152
  %v162 = vpack.c.bf16 %v155, %v154
  %s163 = scalar_lea.vmem %s0, 32
  %v164 = vld [vmem:[%s163] sm:$0xf]
  %v165 = vld [vmem:[%s163 + $0x4] sm:$0xf]
  %v166 = vld [vmem:[%s163 + $0x8] sm:$0xf]
  %v167 = vld [vmem:[%s163 + $0xc] sm:$0xf]
  %v168 = vunpack.c.l.bf16 %v164
  %v169 = vunpack.c.l.bf16 %v165
  %v170 = vunpack.c.l.bf16 %v166
  %v171 = vunpack.c.l.bf16 %v167
  %172 = vmatpush.bf16.msra.mxu0 %v111
  %173 = vmatpush.bf16.msra.mxu0 %v110
  %174 = vmatpush.bf16.msra.mxu0 %v109
  %175 = vmatpush.bf16.msra.mxu0 %v108
  %176 = vmatpush.bf16.msra.mxu0 %v107
  %177 = vmatpush.bf16.msra.mxu0 %v106
  %178 = vmatpush.bf16.msra.mxu0 %v105
  %179 = vmatpush.bf16.msra.mxu0 %v104
  %180 = vmatmul.bf16.gmra.mxu0 %v161
  %v181 = vpop.f32.mrf.mxu0
  %v182 = vadd.f32 %v58, %v181
  %v183 = vpop.f32.mrf.mxu0
  %v184 = vadd.f32 %v58, %v183
  %185 = vmatmul.bf16.gmra.mxu0 %v162
  %v186 = vpop.f32.mrf.mxu0
  %v187 = vadd.f32 %v58, %v186
  %v188 = vpop.f32.mrf.mxu0
  %v189 = vadd.f32 %v58, %v188
  %190 = vdwg.mxu0
  %vm191 = vcmp.gt.f32.partialorder %v182, 0.0
  %vm192 = vcmp.gt.f32.partialorder %v184, 0.0
  %vm193 = vcmp.gt.f32.partialorder %v187, 0.0
  %vm194 = vcmp.gt.f32.partialorder %v189, 0.0
  %v195 = vmul.f32 %v143, %v182
  %v196 = vmul.f32 %v143, %v184
  %v197 = vmul.f32 %v143, %v187
  %v198 = vmul.f32 %v143, %v189
  %v199 = vsel %vm191, %v182, %v195
  %v200 = vsel %vm192, %v184, %v196
  %v201 = vsel %vm193, %v187, %v197
  %v202 = vsel %vm194, %v189, %v198
  %v203 = vadd.f32 %v199, %v168
  %v204 = vadd.f32 %v200, %v169
  %v205 = vadd.f32 %v201, %v170
  %v206 = vadd.f32 %v202, %v171
  %s207 = scalar_lea.vmem %s4, 64
  %208 = vst [vmem:[%s207] sm:$0xff] %v203
  %209 = vst [vmem:[%s207 + $0x8] sm:$0xff] %v204
  %210 = vst [vmem:[%s207 + $0x10] sm:$0xff] %v205
  %211 = vst [vmem:[%s207 + $0x18] sm:$0xff] %v206
  %v212 = vpack.c.bf16 %v204, %v203
  %v213 = vpack.c.bf16 %v206, %v205
  %s214 = scalar_lea.vmem %s0, 48
  %v215 = vld [vmem:[%s214] sm:$0xf]
  %v216 = vld [vmem:[%s214 + $0x4] sm:$0xf]
  %v217 = vld [vmem:[%s214 + $0x8] sm:$0xf]
  %v218 = vld [vmem:[%s214 + $0xc] sm:$0xf]
  %v219 = vunpack.c.l.bf16 %v215
  %v220 = vunpack.c.l.bf16 %v216
  %v221 = vunpack.c.l.bf16 %v217
  %v222 = vunpack.c.l.bf16 %v218
  %223 = vmatpush.bf16.msra.mxu0 %v111
  %224 = vmatpush.bf16.msra.mxu0 %v110
  %225 = vmatpush.bf16.msra.mxu0 %v109
  %226 = vmatpush.bf16.msra.mxu0 %v108
  %227 = vmatpush.bf16.msra.mxu0 %v107
  %228 = vmatpush.bf16.msra.mxu0 %v106
  %229 = vmatpush.bf16.msra.mxu0 %v105
  %230 = vmatpush.bf16.msra.mxu0 %v104
  %231 = vmatmul.bf16.gmra.mxu0 %v212
  %v232 = vpop.f32.mrf.mxu0
  %v233 = vadd.f32 %v58, %v232
  %v234 = vpop.f32.mrf.mxu0
  %v235 = vadd.f32 %v58, %v234
  %236 = vmatmul.bf16.gmra.mxu0 %v213
  %v237 = vpop.f32.mrf.mxu0
  %v238 = vadd.f32 %v58, %v237
  %v239 = vpop.f32.mrf.mxu0
  %v240 = vadd.f32 %v58, %v239
  %241 = vdwg.mxu0
  %vm242 = vcmp.gt.f32.partialorder %v233, 0.0
  %vm243 = vcmp.gt.f32.partialorder %v235, 0.0
  %vm244 = vcmp.gt.f32.partialorder %v238, 0.0
  %vm245 = vcmp.gt.f32.partialorder %v240, 0.0
  %v246 = vmul.f32 %v143, %v233
  %v247 = vmul.f32 %v143, %v235
  %v248 = vmul.f32 %v143, %v238
  %v249 = vmul.f32 %v143, %v240
  %v250 = vsel %vm242, %v233, %v246
  %v251 = vsel %vm243, %v235, %v247
  %v252 = vsel %vm244, %v238, %v248
  %v253 = vsel %vm245, %v240, %v249
  %v254 = vadd.f32 %v250, %v219
  %v255 = vadd.f32 %v251, %v220
  %v256 = vadd.f32 %v252, %v221
  %v257 = vadd.f32 %v253, %v222
  %s258 = scalar_lea.vmem %s4, 96
  %259 = vst [vmem:[%s258] sm:$0xff] %v254
  %260 = vst [vmem:[%s258 + $0x8] sm:$0xff] %v255
  %261 = vst [vmem:[%s258 + $0x10] sm:$0xff] %v256
  %262 = vst [vmem:[%s258 + $0x18] sm:$0xff] %v257
  %v263 = vpack.c.bf16 %v255, %v254
  %v264 = vpack.c.bf16 %v257, %v256
  %s265 = scalar_lea.vmem %s0, 64
  %v266 = vld [vmem:[%s265] sm:$0xf]
  %v267 = vld [vmem:[%s265 + $0x4] sm:$0xf]
  %v268 = vld [vmem:[%s265 + $0x8] sm:$0xf]
  %v269 = vld [vmem:[%s265 + $0xc] sm:$0xf]
  %v270 = vunpack.c.l.bf16 %v266
  %v271 = vunpack.c.l.bf16 %v267
  %v272 = vunpack.c.l.bf16 %v268
  %v273 = vunpack.c.l.bf16 %v269
  %274 = vmatpush.bf16.msra.mxu0 %v111
  %275 = vmatpush.bf16.msra.mxu0 %v110
  %276 = vmatpush.bf16.msra.mxu0 %v109
  %277 = vmatpush.bf16.msra.mxu0 %v108
  %278 = vmatpush.bf16.msra.mxu0 %v107
  %279 = vmatpush.bf16.msra.mxu0 %v106
  %280 = vmatpush.bf16.msra.mxu0 %v105
  %281 = vmatpush.bf16.msra.mxu0 %v104
  %282 = vmatmul.bf16.gmra.mxu0 %v263
  %v283 = vpop.f32.mrf.mxu0
  %v284 = vadd.f32 %v58, %v283
  %v285 = vpop.f32.mrf.mxu0
  %v286 = vadd.f32 %v58, %v285
  %287 = vmatmul.bf16.gmra.mxu0 %v264
  %v288 = vpop.f32.mrf.mxu0
  %v289 = vadd.f32 %v58, %v288
  %v290 = vpop.f32.mrf.mxu0
  %v291 = vadd.f32 %v58, %v290
  %292 = vdwg.mxu0
  %vm293 = vcmp.gt.f32.partialorder %v284, 0.0
  %vm294 = vcmp.gt.f32.partialorder %v286, 0.0
  %vm295 = vcmp.gt.f32.partialorder %v289, 0.0
  %vm296 = vcmp.gt.f32.partialorder %v291, 0.0
  %v297 = vmul.f32 %v143, %v284
  %v298 = vmul.f32 %v143, %v286
  %v299 = vmul.f32 %v143, %v289
  %v300 = vmul.f32 %v143, %v291
  %v301 = vsel %vm293, %v284, %v297
  %v302 = vsel %vm294, %v286, %v298
  %v303 = vsel %vm295, %v289, %v299
  %v304 = vsel %vm296, %v291, %v300
  %v305 = vadd.f32 %v301, %v270
  %v306 = vadd.f32 %v302, %v271
  %v307 = vadd.f32 %v303, %v272
  %v308 = vadd.f32 %v304, %v273
  %s309 = scalar_lea.vmem %s4, 128
  %310 = vst [vmem:[%s309] sm:$0xff] %v305
  %311 = vst [vmem:[%s309 + $0x8] sm:$0xff] %v306
  %312 = vst [vmem:[%s309 + $0x10] sm:$0xff] %v307
  %313 = vst [vmem:[%s309 + $0x18] sm:$0xff] %v308
  %v314 = vpack.c.bf16 %v306, %v305
  %v315 = vpack.c.bf16 %v308, %v307
  %s316 = scalar_lea.vmem %s0, 80
  %v317 = vld [vmem:[%s316] sm:$0xf]
  %v318 = vld [vmem:[%s316 + $0x4] sm:$0xf]
  %v319 = vld [vmem:[%s316 + $0x8] sm:$0xf]
  %v320 = vld [vmem:[%s316 + $0xc] sm:$0xf]
  %v321 = vunpack.c.l.bf16 %v317
  %v322 = vunpack.c.l.bf16 %v318
  %v323 = vunpack.c.l.bf16 %v319
  %v324 = vunpack.c.l.bf16 %v320
  %325 = vmatpush.bf16.msra.mxu0 %v111
  %326 = vmatpush.bf16.msra.mxu0 %v110
  %327 = vmatpush.bf16.msra.mxu0 %v109
  %328 = vmatpush.bf16.msra.mxu0 %v108
  %329 = vmatpush.bf16.msra.mxu0 %v107
  %330 = vmatpush.bf16.msra.mxu0 %v106
  %331 = vmatpush.bf16.msra.mxu0 %v105
  %332 = vmatpush.bf16.msra.mxu0 %v104
  %333 = vmatmul.bf16.gmra.mxu0 %v314
  %v334 = vpop.f32.mrf.mxu0
  %v335 = vadd.f32 %v58, %v334
  %v336 = vpop.f32.mrf.mxu0
  %v337 = vadd.f32 %v58, %v336
  %338 = vmatmul.bf16.gmra.mxu0 %v315
  %v339 = vpop.f32.mrf.mxu0
  %v340 = vadd.f32 %v58, %v339
  %v341 = vpop.f32.mrf.mxu0
  %v342 = vadd.f32 %v58, %v341
  %343 = vdwg.mxu0
  %vm344 = vcmp.gt.f32.partialorder %v335, 0.0
  %vm345 = vcmp.gt.f32.partialorder %v337, 0.0
  %vm346 = vcmp.gt.f32.partialorder %v340, 0.0
  %vm347 = vcmp.gt.f32.partialorder %v342, 0.0
  %v348 = vmul.f32 %v143, %v335
  %v349 = vmul.f32 %v143, %v337
  %v350 = vmul.f32 %v143, %v340
  %v351 = vmul.f32 %v143, %v342
  %v352 = vsel %vm344, %v335, %v348
  %v353 = vsel %vm345, %v337, %v349
  %v354 = vsel %vm346, %v340, %v350
  %v355 = vsel %vm347, %v342, %v351
  %v356 = vadd.f32 %v352, %v321
  %v357 = vadd.f32 %v353, %v322
  %v358 = vadd.f32 %v354, %v323
  %v359 = vadd.f32 %v355, %v324
  %s360 = scalar_lea.vmem %s4, 160
  %361 = vst [vmem:[%s360] sm:$0xff] %v356
  %362 = vst [vmem:[%s360 + $0x8] sm:$0xff] %v357
  %363 = vst [vmem:[%s360 + $0x10] sm:$0xff] %v358
  %364 = vst [vmem:[%s360 + $0x18] sm:$0xff] %v359
  %v365 = vpack.c.bf16 %v357, %v356
  %v366 = vpack.c.bf16 %v359, %v358
  %s367 = scalar_lea.vmem %s0, 96
  %v368 = vld [vmem:[%s367] sm:$0xf]
  %v369 = vld [vmem:[%s367 + $0x4] sm:$0xf]
  %v370 = vld [vmem:[%s367 + $0x8] sm:$0xf]
  %v371 = vld [vmem:[%s367 + $0xc] sm:$0xf]
  %v372 = vunpack.c.l.bf16 %v368
  %v373 = vunpack.c.l.bf16 %v369
  %v374 = vunpack.c.l.bf16 %v370
  %v375 = vunpack.c.l.bf16 %v371
  %376 = vmatpush.bf16.msra.mxu0 %v111
  %377 = vmatpush.bf16.msra.mxu0 %v110
  %378 = vmatpush.bf16.msra.mxu0 %v109
  %379 = vmatpush.bf16.msra.mxu0 %v108
  %380 = vmatpush.bf16.msra.mxu0 %v107
  %381 = vmatpush.bf16.msra.mxu0 %v106
  %382 = vmatpush.bf16.msra.mxu0 %v105
  %383 = vmatpush.bf16.msra.mxu0 %v104
  %384 = vmatmul.bf16.gmra.mxu0 %v365
  %v385 = vpop.f32.mrf.mxu0
  %v386 = vadd.f32 %v58, %v385
  %v387 = vpop.f32.mrf.mxu0
  %v388 = vadd.f32 %v58, %v387
  %389 = vmatmul.bf16.gmra.mxu0 %v366
  %v390 = vpop.f32.mrf.mxu0
  %v391 = vadd.f32 %v58, %v390
  %v392 = vpop.f32.mrf.mxu0
  %v393 = vadd.f32 %v58, %v392
  %394 = vdwg.mxu0
  %vm395 = vcmp.gt.f32.partialorder %v386, 0.0
  %vm396 = vcmp.gt.f32.partialorder %v388, 0.0
  %vm397 = vcmp.gt.f32.partialorder %v391, 0.0
  %vm398 = vcmp.gt.f32.partialorder %v393, 0.0
  %v399 = vmul.f32 %v143, %v386
  %v400 = vmul.f32 %v143, %v388
  %v401 = vmul.f32 %v143, %v391
  %v402 = vmul.f32 %v143, %v393
  %v403 = vsel %vm395, %v386, %v399
  %v404 = vsel %vm396, %v388, %v400
  %v405 = vsel %vm397, %v391, %v401
  %v406 = vsel %vm398, %v393, %v402
  %v407 = vadd.f32 %v403, %v372
  %v408 = vadd.f32 %v404, %v373
  %v409 = vadd.f32 %v405, %v374
  %v410 = vadd.f32 %v406, %v375
  %s411 = scalar_lea.vmem %s4, 192
  %412 = vst [vmem:[%s411] sm:$0xff] %v407
  %413 = vst [vmem:[%s411 + $0x8] sm:$0xff] %v408
  %414 = vst [vmem:[%s411 + $0x10] sm:$0xff] %v409
  %415 = vst [vmem:[%s411 + $0x18] sm:$0xff] %v410
  %v416 = vpack.c.bf16 %v408, %v407
  %v417 = vpack.c.bf16 %v410, %v409
  %s418 = scalar_lea.vmem %s0, 112
  %v419 = vld [vmem:[%s418] sm:$0xf]
  %v420 = vld [vmem:[%s418 + $0x4] sm:$0xf]
  %v421 = vld [vmem:[%s418 + $0x8] sm:$0xf]
  %v422 = vld [vmem:[%s418 + $0xc] sm:$0xf]
  %v423 = vunpack.c.l.bf16 %v419
  %v424 = vunpack.c.l.bf16 %v420
  %v425 = vunpack.c.l.bf16 %v421
  %v426 = vunpack.c.l.bf16 %v422
  %427 = vmatpush.bf16.msra.mxu0 %v111
  %428 = vmatpush.bf16.msra.mxu0 %v110
  %429 = vmatpush.bf16.msra.mxu0 %v109
  %430 = vmatpush.bf16.msra.mxu0 %v108
  %431 = vmatpush.bf16.msra.mxu0 %v107
  %432 = vmatpush.bf16.msra.mxu0 %v106
  %433 = vmatpush.bf16.msra.mxu0 %v105
  %434 = vmatpush.bf16.msra.mxu0 %v104
  %435 = vmatmul.bf16.gmra.mxu0 %v416
  %v436 = vpop.f32.mrf.mxu0
  %v437 = vadd.f32 %v58, %v436
  %v438 = vpop.f32.mrf.mxu0
  %v439 = vadd.f32 %v58, %v438
  %440 = vmatmul.bf16.gmra.mxu0 %v417
  %v441 = vpop.f32.mrf.mxu0
  %v442 = vadd.f32 %v58, %v441
  %v443 = vpop.f32.mrf.mxu0
  %v444 = vadd.f32 %v58, %v443
  %445 = vdwg.mxu0
  %vm446 = vcmp.gt.f32.partialorder %v437, 0.0
  %vm447 = vcmp.gt.f32.partialorder %v439, 0.0
  %vm448 = vcmp.gt.f32.partialorder %v442, 0.0
  %vm449 = vcmp.gt.f32.partialorder %v444, 0.0
  %v450 = vmul.f32 %v143, %v437
  %v451 = vmul.f32 %v143, %v439
  %v452 = vmul.f32 %v143, %v442
  %v453 = vmul.f32 %v143, %v444
  %v454 = vsel %vm446, %v437, %v450
  %v455 = vsel %vm447, %v439, %v451
  %v456 = vsel %vm448, %v442, %v452
  %v457 = vsel %vm449, %v444, %v453
  %v458 = vadd.f32 %v454, %v423
  %v459 = vadd.f32 %v455, %v424
  %v460 = vadd.f32 %v456, %v425
  %v461 = vadd.f32 %v457, %v426
  %s462 = scalar_lea.vmem %s4, 224
  %463 = vst [vmem:[%s462] sm:$0xff] %v458
  %464 = vst [vmem:[%s462 + $0x8] sm:$0xff] %v459
  %465 = vst [vmem:[%s462 + $0x10] sm:$0xff] %v460
  %466 = vst [vmem:[%s462 + $0x18] sm:$0xff] %v461
  %v467 = vpack.c.bf16 %v459, %v458
  %v468 = vpack.c.bf16 %v461, %v460
  %v469 = vld [vmem:[%s411] sm:$0xff]
  %v470 = vld [vmem:[%s411 + $0x8] sm:$0xff]
  %v471 = vld [vmem:[%s411 + $0x10] sm:$0xff]
  %v472 = vld [vmem:[%s411 + $0x18] sm:$0xff]
  %473 = vmatpush.bf16.msra.mxu0 %v111
  %474 = vmatpush.bf16.msra.mxu0 %v110
  %475 = vmatpush.bf16.msra.mxu0 %v109
  %476 = vmatpush.bf16.msra.mxu0 %v108
  %477 = vmatpush.bf16.msra.mxu0 %v107
  %478 = vmatpush.bf16.msra.mxu0 %v106
  %479 = vmatpush.bf16.msra.mxu0 %v105
  %480 = vmatpush.bf16.msra.mxu0 %v104
  %481 = vmatmul.bf16.gmra.mxu0 %v467
  %v482 = vpop.f32.mrf.mxu0
  %v483 = vadd.f32 %v58, %v482
  %v484 = vpop.f32.mrf.mxu0
  %v485 = vadd.f32 %v58, %v484
  %486 = vmatmul.bf16.gmra.mxu0 %v468
  %v487 = vpop.f32.mrf.mxu0
  %v488 = vadd.f32 %v58, %v487
  %v489 = vpop.f32.mrf.mxu0
  %v490 = vadd.f32 %v58, %v489
  %491 = vdwg.mxu0
  %vm492 = vcmp.gt.f32.partialorder %v483, 0.0
  %vm493 = vcmp.gt.f32.partialorder %v485, 0.0
  %vm494 = vcmp.gt.f32.partialorder %v488, 0.0
  %vm495 = vcmp.gt.f32.partialorder %v490, 0.0
  %v496 = vmul.f32 %v143, %v483
  %v497 = vmul.f32 %v143, %v485
  %v498 = vmul.f32 %v143, %v488
  %v499 = vmul.f32 %v143, %v490
  %v500 = vsel %vm492, %v483, %v496
  %v501 = vsel %vm493, %v485, %v497
  %v502 = vsel %vm494, %v488, %v498
  %v503 = vsel %vm495, %v490, %v499
  %v504 = vadd.f32 %v500, %v469
  %v505 = vadd.f32 %v501, %v470
  %v506 = vadd.f32 %v502, %v471
  %v507 = vadd.f32 %v503, %v472
  %508 = vst [vmem:[%s411] sm:$0xff] %v504
  %509 = vst [vmem:[%s411 + $0x8] sm:$0xff] %v505
  %510 = vst [vmem:[%s411 + $0x10] sm:$0xff] %v506
  %511 = vst [vmem:[%s411 + $0x18] sm:$0xff] %v507
  %v512 = vpack.c.bf16 %v505, %v504
  %v513 = vpack.c.bf16 %v507, %v506
  %v514 = vld [vmem:[%s360] sm:$0xff]
  %v515 = vld [vmem:[%s360 + $0x8] sm:$0xff]
  %v516 = vld [vmem:[%s360 + $0x10] sm:$0xff]
  %v517 = vld [vmem:[%s360 + $0x18] sm:$0xff]
  %518 = vmatpush.bf16.msra.mxu0 %v111
  %519 = vmatpush.bf16.msra.mxu0 %v110
  %520 = vmatpush.bf16.msra.mxu0 %v109
  %521 = vmatpush.bf16.msra.mxu0 %v108
  %522 = vmatpush.bf16.msra.mxu0 %v107
  %523 = vmatpush.bf16.msra.mxu0 %v106
  %524 = vmatpush.bf16.msra.mxu0 %v105
  %525 = vmatpush.bf16.msra.mxu0 %v104
  %526 = vmatmul.bf16.gmra.mxu0 %v512
  %v527 = vpop.f32.mrf.mxu0
  %v528 = vadd.f32 %v58, %v527
  %v529 = vpop.f32.mrf.mxu0
  %v530 = vadd.f32 %v58, %v529
  %531 = vmatmul.bf16.gmra.mxu0 %v513
  %v532 = vpop.f32.mrf.mxu0
  %v533 = vadd.f32 %v58, %v532
  %v534 = vpop.f32.mrf.mxu0
  %v535 = vadd.f32 %v58, %v534
  %536 = vdwg.mxu0
  %vm537 = vcmp.gt.f32.partialorder %v528, 0.0
  %vm538 = vcmp.gt.f32.partialorder %v530, 0.0
  %vm539 = vcmp.gt.f32.partialorder %v533, 0.0
  %vm540 = vcmp.gt.f32.partialorder %v535, 0.0
  %v541 = vmul.f32 %v143, %v528
  %v542 = vmul.f32 %v143, %v530
  %v543 = vmul.f32 %v143, %v533
  %v544 = vmul.f32 %v143, %v535
  %v545 = vsel %vm537, %v528, %v541
  %v546 = vsel %vm538, %v530, %v542
  %v547 = vsel %vm539, %v533, %v543
  %v548 = vsel %vm540, %v535, %v544
  %v549 = vadd.f32 %v545, %v514
  %v550 = vadd.f32 %v546, %v515
  %v551 = vadd.f32 %v547, %v516
  %v552 = vadd.f32 %v548, %v517
  %553 = vst [vmem:[%s360] sm:$0xff] %v549
  %554 = vst [vmem:[%s360 + $0x8] sm:$0xff] %v550
  %555 = vst [vmem:[%s360 + $0x10] sm:$0xff] %v551
  %556 = vst [vmem:[%s360 + $0x18] sm:$0xff] %v552
  %v557 = vpack.c.bf16 %v550, %v549
  %v558 = vpack.c.bf16 %v552, %v551
  %v559 = vld [vmem:[%s309] sm:$0xff]
  %v560 = vld [vmem:[%s309 + $0x8] sm:$0xff]
  %v561 = vld [vmem:[%s309 + $0x10] sm:$0xff]
  %v562 = vld [vmem:[%s309 + $0x18] sm:$0xff]
  %563 = vmatpush.bf16.msra.mxu0 %v111
  %564 = vmatpush.bf16.msra.mxu0 %v110
  %565 = vmatpush.bf16.msra.mxu0 %v109
  %566 = vmatpush.bf16.msra.mxu0 %v108
  %567 = vmatpush.bf16.msra.mxu0 %v107
  %568 = vmatpush.bf16.msra.mxu0 %v106
  %569 = vmatpush.bf16.msra.mxu0 %v105
  %570 = vmatpush.bf16.msra.mxu0 %v104
  %571 = vmatmul.bf16.gmra.mxu0 %v557
  %v572 = vpop.f32.mrf.mxu0
  %v573 = vadd.f32 %v58, %v572
  %v574 = vpop.f32.mrf.mxu0
  %v575 = vadd.f32 %v58, %v574
  %576 = vmatmul.bf16.gmra.mxu0 %v558
  %v577 = vpop.f32.mrf.mxu0
  %v578 = vadd.f32 %v58, %v577
  %v579 = vpop.f32.mrf.mxu0
  %v580 = vadd.f32 %v58, %v579
  %581 = vdwg.mxu0
  %vm582 = vcmp.gt.f32.partialorder %v573, 0.0
  %vm583 = vcmp.gt.f32.partialorder %v575, 0.0
  %vm584 = vcmp.gt.f32.partialorder %v578, 0.0
  %vm585 = vcmp.gt.f32.partialorder %v580, 0.0
  %v586 = vmul.f32 %v143, %v573
  %v587 = vmul.f32 %v143, %v575
  %v588 = vmul.f32 %v143, %v578
  %v589 = vmul.f32 %v143, %v580
  %v590 = vsel %vm582, %v573, %v586
  %v591 = vsel %vm583, %v575, %v587
  %v592 = vsel %vm584, %v578, %v588
  %v593 = vsel %vm585, %v580, %v589
  %v594 = vadd.f32 %v590, %v559
  %v595 = vadd.f32 %v591, %v560
  %v596 = vadd.f32 %v592, %v561
  %v597 = vadd.f32 %v593, %v562
  %598 = vst [vmem:[%s309] sm:$0xff] %v594
  %599 = vst [vmem:[%s309 + $0x8] sm:$0xff] %v595
  %600 = vst [vmem:[%s309 + $0x10] sm:$0xff] %v596
  %601 = vst [vmem:[%s309 + $0x18] sm:$0xff] %v597
  %v602 = vpack.c.bf16 %v595, %v594
  %v603 = vpack.c.bf16 %v597, %v596
  %v604 = vld [vmem:[%s258] sm:$0xff]
  %v605 = vld [vmem:[%s258 + $0x8] sm:$0xff]
  %v606 = vld [vmem:[%s258 + $0x10] sm:$0xff]
  %v607 = vld [vmem:[%s258 + $0x18] sm:$0xff]
  %608 = vmatpush.bf16.msra.mxu0 %v111
  %609 = vmatpush.bf16.msra.mxu0 %v110
  %610 = vmatpush.bf16.msra.mxu0 %v109
  %611 = vmatpush.bf16.msra.mxu0 %v108
  %612 = vmatpush.bf16.msra.mxu0 %v107
  %613 = vmatpush.bf16.msra.mxu0 %v106
  %614 = vmatpush.bf16.msra.mxu0 %v105
  %615 = vmatpush.bf16.msra.mxu0 %v104
  %616 = vmatmul.bf16.gmra.mxu0 %v602
  %v617 = vpop.f32.mrf.mxu0
  %v618 = vadd.f32 %v58, %v617
  %v619 = vpop.f32.mrf.mxu0
  %v620 = vadd.f32 %v58, %v619
  %621 = vmatmul.bf16.gmra.mxu0 %v603
  %v622 = vpop.f32.mrf.mxu0
  %v623 = vadd.f32 %v58, %v622
  %v624 = vpop.f32.mrf.mxu0
  %v625 = vadd.f32 %v58, %v624
  %626 = vdwg.mxu0
  %vm627 = vcmp.gt.f32.partialorder %v618, 0.0
  %vm628 = vcmp.gt.f32.partialorder %v620, 0.0
  %vm629 = vcmp.gt.f32.partialorder %v623, 0.0
  %vm630 = vcmp.gt.f32.partialorder %v625, 0.0
  %v631 = vmul.f32 %v143, %v618
  %v632 = vmul.f32 %v143, %v620
  %v633 = vmul.f32 %v143, %v623
  %v634 = vmul.f32 %v143, %v625
  %v635 = vsel %vm627, %v618, %v631
  %v636 = vsel %vm628, %v620, %v632
  %v637 = vsel %vm629, %v623, %v633
  %v638 = vsel %vm630, %v625, %v634
  %v639 = vadd.f32 %v635, %v604
  %v640 = vadd.f32 %v636, %v605
  %v641 = vadd.f32 %v637, %v606
  %v642 = vadd.f32 %v638, %v607
  %643 = vst [vmem:[%s258] sm:$0xff] %v639
  %644 = vst [vmem:[%s258 + $0x8] sm:$0xff] %v640
  %645 = vst [vmem:[%s258 + $0x10] sm:$0xff] %v641
  %646 = vst [vmem:[%s258 + $0x18] sm:$0xff] %v642
  %v647 = vpack.c.bf16 %v640, %v639
  %v648 = vpack.c.bf16 %v642, %v641
  %v649 = vld [vmem:[%s207] sm:$0xff]
  %v650 = vld [vmem:[%s207 + $0x8] sm:$0xff]
  %v651 = vld [vmem:[%s207 + $0x10] sm:$0xff]
  %v652 = vld [vmem:[%s207 + $0x18] sm:$0xff]
  %653 = vmatpush.bf16.msra.mxu0 %v111
  %654 = vmatpush.bf16.msra.mxu0 %v110
  %655 = vmatpush.bf16.msra.mxu0 %v109
  %656 = vmatpush.bf16.msra.mxu0 %v108
  %657 = vmatpush.bf16.msra.mxu0 %v107
  %658 = vmatpush.bf16.msra.mxu0 %v106
  %659 = vmatpush.bf16.msra.mxu0 %v105
  %660 = vmatpush.bf16.msra.mxu0 %v104
  %661 = vmatmul.bf16.gmra.mxu0 %v647
  %v662 = vpop.f32.mrf.mxu0
  %v663 = vadd.f32 %v58, %v662
  %v664 = vpop.f32.mrf.mxu0
  %v665 = vadd.f32 %v58, %v664
  %666 = vmatmul.bf16.gmra.mxu0 %v648
  %v667 = vpop.f32.mrf.mxu0
  %v668 = vadd.f32 %v58, %v667
  %v669 = vpop.f32.mrf.mxu0
  %v670 = vadd.f32 %v58, %v669
  %671 = vdwg.mxu0
  %vm672 = vcmp.gt.f32.partialorder %v663, 0.0
  %vm673 = vcmp.gt.f32.partialorder %v665, 0.0
  %vm674 = vcmp.gt.f32.partialorder %v668, 0.0
  %vm675 = vcmp.gt.f32.partialorder %v670, 0.0
  %v676 = vmul.f32 %v143, %v663
  %v677 = vmul.f32 %v143, %v665
  %v678 = vmul.f32 %v143, %v668
  %v679 = vmul.f32 %v143, %v670
  %v680 = vsel %vm672, %v663, %v676
  %v681 = vsel %vm673, %v665, %v677
  %v682 = vsel %vm674, %v668, %v678
  %v683 = vsel %vm675, %v670, %v679
  %v684 = vadd.f32 %v680, %v649
  %v685 = vadd.f32 %v681, %v650
  %v686 = vadd.f32 %v682, %v651
  %v687 = vadd.f32 %v683, %v652
  %688 = vst [vmem:[%s207] sm:$0xff] %v684
  %689 = vst [vmem:[%s207 + $0x8] sm:$0xff] %v685
  %690 = vst [vmem:[%s207 + $0x10] sm:$0xff] %v686
  %691 = vst [vmem:[%s207 + $0x18] sm:$0xff] %v687
  %v692 = vpack.c.bf16 %v685, %v684
  %v693 = vpack.c.bf16 %v687, %v686
  %v694 = vld [vmem:[%s156] sm:$0xff]
  %v695 = vld [vmem:[%s156 + $0x8] sm:$0xff]
  %v696 = vld [vmem:[%s156 + $0x10] sm:$0xff]
  %v697 = vld [vmem:[%s156 + $0x18] sm:$0xff]
  %698 = vmatpush.bf16.msra.mxu0 %v111
  %699 = vmatpush.bf16.msra.mxu0 %v110
  %700 = vmatpush.bf16.msra.mxu0 %v109
  %701 = vmatpush.bf16.msra.mxu0 %v108
  %702 = vmatpush.bf16.msra.mxu0 %v107
  %703 = vmatpush.bf16.msra.mxu0 %v106
  %704 = vmatpush.bf16.msra.mxu0 %v105
  %705 = vmatpush.bf16.msra.mxu0 %v104
  %706 = vmatmul.bf16.gmra.mxu0 %v692
  %v707 = vpop.f32.mrf.mxu0
  %v708 = vadd.f32 %v58, %v707
  %v709 = vpop.f32.mrf.mxu0
  %v710 = vadd.f32 %v58, %v709
  %711 = vmatmul.bf16.gmra.mxu0 %v693
  %v712 = vpop.f32.mrf.mxu0
  %v713 = vadd.f32 %v58, %v712
  %v714 = vpop.f32.mrf.mxu0
  %v715 = vadd.f32 %v58, %v714
  %716 = vdwg.mxu0
  %vm717 = vcmp.gt.f32.partialorder %v708, 0.0
  %vm718 = vcmp.gt.f32.partialorder %v710, 0.0
  %vm719 = vcmp.gt.f32.partialorder %v713, 0.0
  %vm720 = vcmp.gt.f32.partialorder %v715, 0.0
  %v721 = vmul.f32 %v143, %v708
  %v722 = vmul.f32 %v143, %v710
  %v723 = vmul.f32 %v143, %v713
  %v724 = vmul.f32 %v143, %v715
  %v725 = vsel %vm717, %v708, %v721
  %v726 = vsel %vm718, %v710, %v722
  %v727 = vsel %vm719, %v713, %v723
  %v728 = vsel %vm720, %v715, %v724
  %v729 = vadd.f32 %v725, %v694
  %v730 = vadd.f32 %v726, %v695
  %v731 = vadd.f32 %v727, %v696
  %v732 = vadd.f32 %v728, %v697
  %733 = vst [vmem:[%s156] sm:$0xff] %v729
  %734 = vst [vmem:[%s156 + $0x8] sm:$0xff] %v730
  %735 = vst [vmem:[%s156 + $0x10] sm:$0xff] %v731
  %736 = vst [vmem:[%s156 + $0x18] sm:$0xff] %v732
  %v737 = vpack.c.bf16 %v730, %v729
  %v738 = vpack.c.bf16 %v732, %v731
  %v739 = vld [vmem:[%s4] sm:$0xff]
  %v740 = vld [vmem:[%s4 + $0x8] sm:$0xff]
  %v741 = vld [vmem:[%s4 + $0x10] sm:$0xff]
  %v742 = vld [vmem:[%s4 + $0x18] sm:$0xff]
  %743 = vmatpush.bf16.msra.mxu0 %v111
  %744 = vmatpush.bf16.msra.mxu0 %v110
  %745 = vmatpush.bf16.msra.mxu0 %v109
  %746 = vmatpush.bf16.msra.mxu0 %v108
  %747 = vmatpush.bf16.msra.mxu0 %v107
  %748 = vmatpush.bf16.msra.mxu0 %v106
  %749 = vmatpush.bf16.msra.mxu0 %v105
  %750 = vmatpush.bf16.msra.mxu0 %v104
  %751 = vmatmul.bf16.gmra.mxu0 %v737
  %v752 = vpop.f32.mrf.mxu0
  %v753 = vadd.f32 %v58, %v752
  %v754 = vpop.f32.mrf.mxu0
  %v755 = vadd.f32 %v58, %v754
  %756 = vmatmul.bf16.gmra.mxu0 %v738
  %v757 = vpop.f32.mrf.mxu0
  %v758 = vadd.f32 %v58, %v757
  %v759 = vpop.f32.mrf.mxu0
  %v760 = vadd.f32 %v58, %v759
  %761 = vdwg.mxu0
  %vm762 = vcmp.gt.f32.partialorder %v753, 0.0
  %vm763 = vcmp.gt.f32.partialorder %v755, 0.0
  %vm764 = vcmp.gt.f32.partialorder %v758, 0.0
  %vm765 = vcmp.gt.f32.partialorder %v760, 0.0
  %v766 = vmul.f32 %v143, %v753
  %v767 = vmul.f32 %v143, %v755
  %v768 = vmul.f32 %v143, %v758
  %v769 = vmul.f32 %v143, %v760
  %v770 = vsel %vm762, %v753, %v766
  %v771 = vsel %vm763, %v755, %v767
  %v772 = vsel %vm764, %v758, %v768
  %v773 = vsel %vm765, %v760, %v769
  %v774 = vadd.f32 %v770, %v739
  %v775 = vadd.f32 %v771, %v740
  %v776 = vadd.f32 %v772, %v741
  %v777 = vadd.f32 %v773, %v742
  %778 = vst [vmem:[%s4] sm:$0xff] %v774
  %779 = vst [vmem:[%s4 + $0x8] sm:$0xff] %v775
  %780 = vst [vmem:[%s4 + $0x10] sm:$0xff] %v776
  %781 = vst [vmem:[%s4 + $0x18] sm:$0xff] %v777
  // Predicated region
  $region18: #{convdu_pallas.1} parent=0 // pred_check
    _
  $region19: #{convdu_pallas.1} parent=0 // pred_check_branch
    %783 = sbr.rel (0) target = $region21
  $region20: #{convdu_pallas.1} parent=0 // pred_region
    _
  $region21: #{convdu_pallas.1} parent=0 // pred_fallthru
    _
  // Predicated region
  $region22: #{convdu_pallas.1} parent=0 // pred_check
    _
  $region23: #{convdu_pallas.1} parent=0 // pred_check_branch
    %785 = sbr.rel (0) target = $region25
  $region24: #{convdu_pallas.1} parent=0 // pred_region
    _
  $region25: #{convdu_pallas.1} parent=0 // pred_fallthru
    _

</llo_original>
